<compile_context>
chip_gen: v7x
topology: tpu7x:2x2x1
jax: 0.10.0
libtpu: 0.0.40
codegen_flags: <defaults>
</compile_context>

<pallas_src>
import numpy as np
import jax
import jax.numpy as jnp
from jax.experimental import pallas as pl
from jax.experimental.pallas import tpu as pltpu

LANE = 128          # TPU lane width
ROW_TILE = 16       # row granularity (native for both f32 and bf16 blocks)
HIDDEN = 100        # true hidden width of the PyTorch module
_TM_CANDIDATES = (16, 32, 64, 128, 256, 512)
_STEP_PENALTY_ROWS = 64   # ~0.35 us/grid-step expressed in "row equivalents"


def _round_up(x, m):
    return (x + m - 1) // m * m


def _choose_tm(batch):
    """Pick a row tile minimizing padded waste + per-step overhead.

    Keeps grid >= 2 whenever the batch is big enough (v7x has 2 TensorCores
    and the parallel axis only shards if grid > 1).
    """
    want_multicore = batch > 8
    best = None
    for tm in _TM_CANDIDATES:
        b_pad = _round_up(batch, tm)
        grid = b_pad // tm
        if want_multicore and grid < 2 and tm != _TM_CANDIDATES[0]:
            continue
        cost = (b_pad + grid * _STEP_PENALTY_ROWS, b_pad, -tm)
        if best is None or cost < best[0]:
            best = (cost, tm, b_pad)
    _, tm, b_pad = best
    return tm, b_pad


def mlp_kernel(x_ref, w1_ref, w2_ref, w3_ref, b_ref, out_ref):
    # x: (TM, D_in) f32 (cast to bf16 here, not in an extra HBM pass);
    # w*: zero-padded bf16; b: (3, 128) f32 rows = (b1, b2, b3).
    b = b_ref[...]
    x = x_ref[...].astype(jnp.bfloat16)
    # Layer 1: bf16 matmul, f32 accumulate, f32 bias + relu.
    h = jnp.dot(x, w1_ref[...], preferred_element_type=jnp.float32)
    h = jnp.maximum(h + b[0:1, :], 0.0)
    # Layer 2.
    h = jnp.dot(h.astype(jnp.bfloat16), w2_ref[...],
                preferred_element_type=jnp.float32)
    h = jnp.maximum(h + b[1:2, :], 0.0)
    # Layer 3 + sigmoid (f32 epilogue; EUP handles the logistic).
    h = jnp.dot(h.astype(jnp.bfloat16), w3_ref[...],
                preferred_element_type=jnp.float32)
    h = h + b[2:3, :]
    out_ref[...] = jax.nn.sigmoid(h).astype(out_ref.dtype)  # bf16 writeback


def init_params(key, input_size, target_size):
    """Returns (padded bf16 kernel params, unpadded f32 master params)."""
    def linear_init(k, fan_in, fan_out):
        kw, kb = jax.random.split(k)
        bound = 1.0 / np.sqrt(fan_in)
        w = jax.random.uniform(kw, (fan_in, fan_out), jnp.float32, -bound, bound)
        bvec = jax.random.uniform(kb, (fan_out,), jnp.float32, -bound, bound)
        return w, bvec

    k1, k2, k3 = jax.random.split(key, 3)
    w1, b1 = linear_init(k1, input_size, HIDDEN)
    w2, b2 = linear_init(k2, HIDDEN, HIDDEN)
    w3, b3 = linear_init(k3, HIDDEN, target_size)
    master = {"w1": w1, "b1": b1, "w2": w2, "b2": b2, "w3": w3, "b3": b3}

    d_in = _round_up(input_size, LANE)
    h_pad = _round_up(HIDDEN, LANE)
    t_pad = _round_up(target_size, LANE)
    # Merged (3, 128) bias layout assumes every output width pads to one lane tile.
    assert h_pad == LANE and t_pad == LANE, "merged bias assumes widths <= 128"

    def pad_w(w, rows, cols):
        out = jnp.zeros((rows, cols), jnp.bfloat16)
        return out.at[:w.shape[0], :w.shape[1]].set(w.astype(jnp.bfloat16))

    bias = jnp.zeros((3, LANE), jnp.float32)
    bias = bias.at[0, :HIDDEN].set(b1)
    bias = bias.at[1, :HIDDEN].set(b2)
    bias = bias.at[2, :target_size].set(b3)

    padded = {
        "w1": pad_w(w1, d_in, h_pad),
        "w2": pad_w(w2, h_pad, h_pad),
        "w3": pad_w(w3, h_pad, t_pad),
        "b": bias,
    }
    return padded, master


def _mlp_jnp(x_flat, params):
    """Plain-jnp fast path for tiny batches (same bf16 math as the kernel)."""
    w1, w2, w3, b = params["w1"], params["w2"], params["w3"], params["b"]
    d_true = x_flat.shape[1]
    h = jnp.dot(x_flat.astype(jnp.bfloat16), w1[:d_true],
                preferred_element_type=jnp.float32)
    h = jnp.maximum(h + b[0:1], 0.0)
    h = jnp.dot(h.astype(jnp.bfloat16), w2, preferred_element_type=jnp.float32)
    h = jnp.maximum(h + b[1:2], 0.0)
    h = jnp.dot(h.astype(jnp.bfloat16), w3, preferred_element_type=jnp.float32)
    return jax.nn.sigmoid(h + b[2:3])


def linear_forward(x, params, target_size, use_pallas=None):
    """x: (B, C, H, W) float32 (NCHW). Returns (B, target_size) float32."""
    B = x.shape[0]
    x_flat = x.reshape(B, -1).astype(jnp.float32)   # x.view(x.size(0), -1)
    d_true = x_flat.shape[1]

    if use_pallas is None:
        use_pallas = B > 64   # tiny batches are pure launch latency in a custom call
    if not use_pallas:
        return _mlp_jnp(x_flat, params)[:, :target_size].astype(jnp.float32)

    w1, w2, w3, b = params["w1"], params["w2"], params["w3"], params["b"]
    d_in, h1 = w1.shape
    h2 = w2.shape[1]
    t_pad = w3.shape[1]

    tm, b_pad = _choose_tm(B)
    # Only pad when the shape is not already tile-aligned; a single fused pad,
    # no cast (the f32->bf16 cast happens inside the kernel).
    if (b_pad, d_in) != (B, d_true):
        x_flat = jnp.pad(x_flat, ((0, b_pad - B), (0, d_in - d_true)))

    flops = 2 * b_pad * (d_in * h1 + h1 * h2 + h2 * t_pad)
    bytes_accessed = (b_pad * d_in * 4            # x (f32 read)
                      + (w1.size + w2.size + w3.size) * 2
                      + b.size * 4
                      + b_pad * t_pad * 2)        # bf16 output writeback

    out_padded = pl.pallas_call(
        mlp_kernel,
        out_shape=jax.ShapeDtypeStruct((b_pad, t_pad), jnp.bfloat16),
        grid=(b_pad // tm,),
        in_specs=[
            pl.BlockSpec((tm, d_in), lambda i: (i, 0)),    # x row tile (f32)
            pl.BlockSpec((d_in, h1), lambda i: (0, 0)),    # w1 resident
            pl.BlockSpec((h1, h2), lambda i: (0, 0)),      # w2 resident
            pl.BlockSpec((h2, t_pad), lambda i: (0, 0)),   # w3 resident
            pl.BlockSpec((3, LANE), lambda i: (0, 0)),     # merged biases
        ],
        out_specs=pl.BlockSpec((tm, t_pad), lambda i: (i, 0)),
        compiler_params=pltpu.CompilerParams(
            dimension_semantics=("parallel",)),
        cost_estimate=pl.CostEstimate(
            flops=flops,
            transcendentals=b_pad * t_pad,
            bytes_accessed=bytes_accessed),
    )(x_flat, w1, w2, w3, b)

    # Drop batch/lane padding and return f32 like the PyTorch module.
    return out_padded[:B, :target_size].astype(jnp.float32)


if __name__ == "__main__":
    key = jax.random.PRNGKey(0)
    k_x, k_p = jax.random.split(key)

    # data_shape = (4, 16, 16) (C, H, W), batch = 2, target_size = 10
    B, C, H, W = 2, 4, 16, 16
    target_size = 10
    input_size = C * H * W  # 1024

    x = jax.random.normal(k_x, (B, C, H, W), dtype=jnp.float32)  # NCHW
    params, master = init_params(k_p, input_size, target_size)

    # Exercise the Pallas kernel explicitly, plus the small-batch fast path.
    out_pallas = jax.block_until_ready(
        linear_forward(x, params, target_size, use_pallas=True))
    out_auto = jax.block_until_ready(linear_forward(x, params, target_size))

    # Pure-JAX f32 reference (kernel uses bf16 matmul inputs -> loosened tol).
    def ref(xn, p):
        xf = xn.reshape(xn.shape[0], -1)
        h = jnp.maximum(xf @ p["w1"] + p["b1"], 0.0)
        h = jnp.maximum(h @ p["w2"] + p["b2"], 0.0)
        return jax.nn.sigmoid(h @ p["w3"] + p["b3"])

    expected = np.asarray(ref(x, master))
    np.testing.assert_allclose(np.asarray(out_pallas), expected,
                               rtol=1e-2, atol=1e-2)
    np.testing.assert_allclose(np.asarray(out_auto), expected,
                               rtol=1e-2, atol=1e-2)

    assert out_pallas.shape == (B, target_size)
    assert out_auto.shape == (B, target_size)
    print("KERNEL_OK")
</pallas_src>

<mosaic_0001>
module attributes {stable_mosaic.version = 11 : i64} {
  func.func @mlp_kernel(%arg0: i32, %arg1: memref<16x1024xf32, #tpu.memory_space<vmem>>, %arg2: memref<1024x128xbf16, #tpu.memory_space<vmem>>, %arg3: memref<128x128xbf16, #tpu.memory_space<vmem>>, %arg4: memref<128x128xbf16, #tpu.memory_space<vmem>>, %arg5: memref<3x128xf32, #tpu.memory_space<vmem>>, %arg6: memref<16x128xbf16, #tpu.memory_space<vmem>>) attributes {dimension_semantics = [#tpu.dimension_semantics<parallel>], iteration_bounds = array<i64: 1>, scalar_prefetch = 0 : i64, scratch_operands = 0 : i64, tpu.core_type = #tpu.core_type<tc>, window_params = [{transform_indices = @transform_0, window_bounds = array<i64: 16, 1024>}, {pipeline_mode = #tpu.pipeline_mode<synchronous>, transform_indices = @transform_1, window_bounds = array<i64: 1024, 128>}, {pipeline_mode = #tpu.pipeline_mode<synchronous>, transform_indices = @transform_2, window_bounds = array<i64: 128, 128>}, {pipeline_mode = #tpu.pipeline_mode<synchronous>, transform_indices = @transform_3, window_bounds = array<i64: 128, 128>}, {pipeline_mode = #tpu.pipeline_mode<synchronous>, transform_indices = @transform_4, window_bounds = array<i64: 3, 128>}, {transform_indices = @transform_5, window_bounds = array<i64: 16, 128>}]} {
    %c0 = arith.constant 0 : index
    %c0_0 = arith.constant 0 : index
    %0 = vector.load %arg5[%c0, %c0_0] : memref<3x128xf32, #tpu.memory_space<vmem>>, vector<3x128xf32>
    %c0_1 = arith.constant 0 : index
    %c0_2 = arith.constant 0 : index
    %1 = vector.load %arg1[%c0_1, %c0_2] : memref<16x1024xf32, #tpu.memory_space<vmem>>, vector<16x1024xf32>
    %2 = arith.truncf %1 : vector<16x1024xf32> to vector<16x1024xbf16>
    %c0_3 = arith.constant 0 : index
    %c0_4 = arith.constant 0 : index
    %3 = vector.load %arg2[%c0_3, %c0_4] : memref<1024x128xbf16, #tpu.memory_space<vmem>>, vector<1024x128xbf16>
    %cst = arith.constant dense<0.000000e+00> : vector<16x128xf32>
    %4 = tpu.matmul %2, %3, %cst {dimension_numbers = #tpu.dot_dimension_numbers<[1], [0], [0], [1], [0, 0, 1, 1], [], []>} : vector<16x1024xbf16>, vector<1024x128xbf16>, vector<16x128xf32> -> vector<16x128xf32>
    %5 = vector.extract_strided_slice %0 {offsets = [0, 0], sizes = [1, 128], strides = [1, 1]} : vector<3x128xf32> to vector<1x128xf32>
    %6 = vector.broadcast %5 : vector<1x128xf32> to vector<16x128xf32>
    %7 = arith.addf %4, %6 : vector<16x128xf32>
    %cst_5 = arith.constant 0.000000e+00 : f32
    %8 = vector.broadcast %cst_5 : f32 to vector<16x128xf32>
    %9 = arith.maximumf %7, %8 : vector<16x128xf32>
    %10 = arith.truncf %9 : vector<16x128xf32> to vector<16x128xbf16>
    %c0_6 = arith.constant 0 : index
    %c0_7 = arith.constant 0 : index
    %11 = vector.load %arg3[%c0_6, %c0_7] : memref<128x128xbf16, #tpu.memory_space<vmem>>, vector<128x128xbf16>
    %cst_8 = arith.constant dense<0.000000e+00> : vector<16x128xf32>
    %12 = tpu.matmul %10, %11, %cst_8 {dimension_numbers = #tpu.dot_dimension_numbers<[1], [0], [0], [1], [0, 0, 1, 1], [], []>} : vector<16x128xbf16>, vector<128x128xbf16>, vector<16x128xf32> -> vector<16x128xf32>
    %13 = vector.extract_strided_slice %0 {offsets = [1, 0], sizes = [1, 128], strides = [1, 1]} : vector<3x128xf32> to vector<1x128xf32>
    %14 = vector.broadcast %13 : vector<1x128xf32> to vector<16x128xf32>
    %15 = arith.addf %12, %14 : vector<16x128xf32>
    %cst_9 = arith.constant 0.000000e+00 : f32
    %16 = vector.broadcast %cst_9 : f32 to vector<16x128xf32>
    %17 = arith.maximumf %15, %16 : vector<16x128xf32>
    %18 = arith.truncf %17 : vector<16x128xf32> to vector<16x128xbf16>
    %c0_10 = arith.constant 0 : index
    %c0_11 = arith.constant 0 : index
    %19 = vector.load %arg4[%c0_10, %c0_11] : memref<128x128xbf16, #tpu.memory_space<vmem>>, vector<128x128xbf16>
    %cst_12 = arith.constant dense<0.000000e+00> : vector<16x128xf32>
    %20 = tpu.matmul %18, %19, %cst_12 {dimension_numbers = #tpu.dot_dimension_numbers<[1], [0], [0], [1], [0, 0, 1, 1], [], []>} : vector<16x128xbf16>, vector<128x128xbf16>, vector<16x128xf32> -> vector<16x128xf32>
    %21 = vector.extract_strided_slice %0 {offsets = [2, 0], sizes = [1, 128], strides = [1, 1]} : vector<3x128xf32> to vector<1x128xf32>
    %22 = vector.broadcast %21 : vector<1x128xf32> to vector<16x128xf32>
    %23 = arith.addf %20, %22 : vector<16x128xf32>
    %24 = arith.negf %23 : vector<16x128xf32>
    %25 = math.exp %24 : vector<16x128xf32>
    %cst_13 = arith.constant 1.000000e+00 : f32
    %26 = vector.broadcast %cst_13 : f32 to vector<16x128xf32>
    %27 = arith.addf %26, %25 : vector<16x128xf32>
    %28 = arith.divf %26, %27 : vector<16x128xf32>
    %29 = arith.truncf %28 : vector<16x128xf32> to vector<16x128xbf16>
    %c0_14 = arith.constant 0 : index
    %c0_15 = arith.constant 0 : index
    %30 = vector.load %arg6[%c0_14, %c0_15] : memref<16x128xbf16, #tpu.memory_space<vmem>>, vector<16x128xbf16>
    tpu.vector_store %arg6[%c0_14, %c0_15], %29 {strides = array<i32>} : memref<16x128xbf16, #tpu.memory_space<vmem>>, vector<16x128xbf16>,
    return
  }
  func.func @transform_0(%arg0: i32) -> (i32, i32) {
    %c0_i32 = arith.constant 0 : i32
    %c0_i32_0 = arith.constant 0 : i32
    return %arg0, %c0_i32 : i32, i32
  }
  func.func @transform_1(%arg0: i32) -> (i32, i32) {
    %c0_i32 = arith.constant 0 : i32
    %c0_i32_0 = arith.constant 0 : i32
    %c0_i32_1 = arith.constant 0 : i32
    return %c0_i32, %c0_i32_0 : i32, i32
  }
  func.func @transform_2(%arg0: i32) -> (i32, i32) {
    %c0_i32 = arith.constant 0 : i32
    %c0_i32_0 = arith.constant 0 : i32
    %c0_i32_1 = arith.constant 0 : i32
    return %c0_i32, %c0_i32_0 : i32, i32
  }
  func.func @transform_3(%arg0: i32) -> (i32, i32) {
    %c0_i32 = arith.constant 0 : i32
    %c0_i32_0 = arith.constant 0 : i32
    %c0_i32_1 = arith.constant 0 : i32
    return %c0_i32, %c0_i32_0 : i32, i32
  }
  func.func @transform_4(%arg0: i32) -> (i32, i32) {
    %c0_i32 = arith.constant 0 : i32
    %c0_i32_0 = arith.constant 0 : i32
    %c0_i32_1 = arith.constant 0 : i32
    return %c0_i32, %c0_i32_0 : i32, i32
  }
  func.func @transform_5(%arg0: i32) -> (i32, i32) {
    %c0_i32 = arith.constant 0 : i32
    %c0_i32_0 = arith.constant 0 : i32
    return %arg0, %c0_i32 : i32, i32
  }
}

</mosaic_0001>

<llo_original>
// kernel: tpu_custom_call.1
$region0: #{tpu_custom_call.1}
  #allocation0 [shape = 'u32[]', space=smem, size = 0x4, offset = 0x4, fixed_abs, tag = 'smem constant byte address 0x4 - core index']
  #allocation1 [shape = 'u32[144,128]{1,0:T(1,128)}', space=vmem, size = 0x12000, scoped, tag = 'internal scratch']
  %s0 = inlined_call_operand.hbm [shape: f32[16,1024], index: 0, kind: input, shape index: {}]
  %s1 = inlined_call_operand.hbm [shape: bf16[1024,128], index: 1, kind: input, shape index: {}]
  %s2 = inlined_call_operand.hbm [shape: bf16[128,128], index: 2, kind: input, shape index: {}]
  %s3 = inlined_call_operand.hbm [shape: bf16[128,128], index: 3, kind: input, shape index: {}]
  %s4 = inlined_call_operand.vmem [shape: f32[3,128], index: 4, kind: input, shape index: {}]
  %s5 = inlined_call_operand.hbm [shape: bf16[16,128], index: 5, kind: output, shape index: {}]
  %s6 = sld [smem:[#allocation0]]
  $region46: #{tpu_custom_call.1} parent=0
    _
  %s8 = ssub.s32 1, %s6
  %s9 = scalar_select 0, %s8, %s6
  $region1: #{tpu_custom_call.1} parent=0
    #allocation2 [shape = 'u8[65536]{0}', space=vmem, size = 0x10000, scoped, tag = 'input window, operand 0, single buffered']
    #allocation3 [shape = 's32[1]{0}', space=sflag, size = 0x4, scoped, tag = 'scoped memory for tpu_custom_call.1']
    #allocation4 [shape = 's32[1]{0}', space=sflag, size = 0x4, scoped, tag = 'scoped memory for tpu_custom_call.1']
    #allocation5 [shape = 'u8[262144]{0}', space=vmem, size = 0x40000, scoped, tag = 'input window, operand 1, single buffered']
    #allocation6 [shape = 's32[1]{0}', space=sflag, size = 0x4, scoped, tag = 'scoped memory for tpu_custom_call.1']
    #allocation7 [shape = 'u8[32768]{0}', space=vmem, size = 0x8000, scoped, tag = 'input window, operand 2, single buffered']
    #allocation8 [shape = 'u8[32768]{0}', space=vmem, size = 0x8000, scoped, tag = 'input window, operand 3, single buffered']
    #allocation9 [shape = 's32[1]{0}', space=sflag, size = 0x4, scoped, tag = 'scoped memory for tpu_custom_call.1']
    #allocation10 [shape = 'u8[4096]{0}', space=vmem, size = 0x1000, scoped, tag = 'output window, operand 0, single buffered']
    %10 = vsyncpa [#allocation3], 0
    %11 = vsyncpa [#allocation6], 0
    %12 = vsyncpa [#allocation9], 0
    %13 = vsyncpa [#allocation4], 0
    // Predicated region
    $region2: #{tpu_custom_call.1} parent=1 // pred_check
      _
    $region3: #{tpu_custom_call.1} parent=1 // pred_check_branch
      %15 = sbr.rel (0) target = $region5
    $region4: #{tpu_custom_call.1} parent=1 // pred_region
      %s17 = ssub.s32 2048, 2048
      %18 = vsyncadd [#allocation3], %s17
      %s19 = sshll.u32 [#allocation2], 4
      %s20 = int_to_ptr.vmem [resolvable:$true] %s19
      %25 = dma.hbm_to_vmem [thread:$0]  %s0, 2048, %s20, [#allocation3], 1024, 1024, 64
    $region5: #{tpu_custom_call.1} parent=1 // pred_fallthru
      _
    // Predicated region
    $region6: #{tpu_custom_call.1} parent=1 // pred_check
      _
    $region7: #{tpu_custom_call.1} parent=1 // pred_check_branch
      %27 = sbr.rel (0) target = $region9
    $region8: #{tpu_custom_call.1} parent=1 // pred_region
      %s29 = ssub.s32 8192, 8192
      %30 = vsyncadd [#allocation6], %s29
      %s31 = sshll.u32 [#allocation5], 4
      %s32 = int_to_ptr.vmem [resolvable:$true] %s31
      %37 = dma.hbm_to_vmem [thread:$0]  %s1, 8192, %s32, [#allocation6], 64, 64, 4
    $region9: #{tpu_custom_call.1} parent=1 // pred_fallthru
      _
    // Predicated region
    $region10: #{tpu_custom_call.1} parent=1 // pred_check
      _
    $region11: #{tpu_custom_call.1} parent=1 // pred_check_branch
      %39 = sbr.rel (0) target = $region13
    $region12: #{tpu_custom_call.1} parent=1 // pred_region
      %s41 = ssub.s32 1024, 1024
      %42 = vsyncadd [#allocation6], %s41
      %s43 = sshll.u32 [#allocation7], 4
      %s44 = int_to_ptr.vmem [resolvable:$true] %s43
      %49 = dma.hbm_to_vmem [thread:$0]  %s2, 1024, %s44, [#allocation6], 64, 64, 4
    $region13: #{tpu_custom_call.1} parent=1 // pred_fallthru
      _
    // Predicated region
    $region14: #{tpu_custom_call.1} parent=1 // pred_check
      _
    $region15: #{tpu_custom_call.1} parent=1 // pred_check_branch
      %51 = sbr.rel (0) target = $region17
    $region16: #{tpu_custom_call.1} parent=1 // pred_region
      %s53 = ssub.s32 1024, 1024
      %54 = vsyncadd [#allocation9], %s53
      %s55 = sshll.u32 [#allocation8], 4
      %s56 = int_to_ptr.vmem [resolvable:$true] %s55
      %61 = dma.hbm_to_vmem [thread:$0]  %s3, 1024, %s56, [#allocation9], 64, 64, 4
    $region17: #{tpu_custom_call.1} parent=1 // pred_fallthru
      _
    // Predicated region
    $region18: #{tpu_custom_call.1} parent=1 // pred_check
      _
    $region19: #{tpu_custom_call.1} parent=1 // pred_check_branch
      %63 = sbr.rel (0) target = $region21
    $region20: #{tpu_custom_call.1} parent=1 // pred_region
      _
    $region21: #{tpu_custom_call.1} parent=1 // pred_fallthru
      _
    // Predicated region
    $region22: #{tpu_custom_call.1} parent=1 // pred_check
      _
    $region23: #{tpu_custom_call.1} parent=1 // pred_check_branch
      %65 = sbr.rel (0) target = $region25
    $region24: #{tpu_custom_call.1} parent=1 // pred_region
      %66 = dma.done [#allocation3], 2048
    $region25: #{tpu_custom_call.1} parent=1 // pred_fallthru
      _
    // Predicated region
    $region26: #{tpu_custom_call.1} parent=1 // pred_check
      _
    $region27: #{tpu_custom_call.1} parent=1 // pred_check_branch
      %68 = sbr.rel (0) target = $region29
    $region28: #{tpu_custom_call.1} parent=1 // pred_region
      %69 = dma.done [#allocation6], 8192
    $region29: #{tpu_custom_call.1} parent=1 // pred_fallthru
      _
    // Predicated region
    $region30: #{tpu_custom_call.1} parent=1 // pred_check
      _
    $region31: #{tpu_custom_call.1} parent=1 // pred_check_branch
      %71 = sbr.rel (0) target = $region33
    $region32: #{tpu_custom_call.1} parent=1 // pred_region
      %72 = dma.done [#allocation6], 1024
    $region33: #{tpu_custom_call.1} parent=1 // pred_fallthru
      _
    // Predicated region
    $region34: #{tpu_custom_call.1} parent=1 // pred_check
      _
    $region35: #{tpu_custom_call.1} parent=1 // pred_check_branch
      %74 = sbr.rel (0) target = $region37
    $region36: #{tpu_custom_call.1} parent=1 // pred_region
      %75 = dma.done [#allocation9], 1024
    $region37: #{tpu_custom_call.1} parent=1 // pred_fallthru
      _
    %v77 = vld [vmem:[%s4] sm:$0x7]
    %v78 = vld [vmem:[#allocation2] sm:$0xff]
    %v79 = vld [vmem:[#allocation2 + $0x8] sm:$0xff]
    %v80 = vld [vmem:[#allocation2 + $0x10] sm:$0xff]
    %v81 = vld [vmem:[#allocation2 + $0x18] sm:$0xff]
    %v82 = vld [vmem:[#allocation2 + $0x20] sm:$0xff]
    %v83 = vld [vmem:[#allocation2 + $0x28] sm:$0xff]
    %v84 = vld [vmem:[#allocation2 + $0x30] sm:$0xff]
    %v85 = vld [vmem:[#allocation2 + $0x38] sm:$0xff]
    %v86 = vld [vmem:[#allocation2 + $0x40] sm:$0xff]
    %v87 = vld [vmem:[#allocation2 + $0x48] sm:$0xff]
    %v88 = vld [vmem:[#allocation2 + $0x50] sm:$0xff]
    %v89 = vld [vmem:[#allocation2 + $0x58] sm:$0xff]
    %v90 = vld [vmem:[#allocation2 + $0x60] sm:$0xff]
    %v91 = vld [vmem:[#allocation2 + $0x68] sm:$0xff]
    %v92 = vld [vmem:[#allocation2 + $0x70] sm:$0xff]
    %v93 = vld [vmem:[#allocation2 + $0x78] sm:$0xff]
    %v94 = vpack.c.bf16 %v86, %v78
    %v95 = vpack.c.bf16 %v87, %v79
    %v96 = vpack.c.bf16 %v88, %v80
    %v97 = vpack.c.bf16 %v89, %v81
    %v98 = vpack.c.bf16 %v90, %v82
    %v99 = vpack.c.bf16 %v91, %v83
    %v100 = vpack.c.bf16 %v92, %v84
    %v101 = vpack.c.bf16 %v93, %v85
    %v102 = vld [vmem:[#allocation5] sm:$0xf]
    %v103 = vld [vmem:[#allocation5 + $0x4] sm:$0xf]
    %v104 = vld [vmem:[#allocation5 + $0x8] sm:$0xf]
    %v105 = vld [vmem:[#allocation5 + $0xc] sm:$0xf]
    %v106 = vld [vmem:[#allocation5 + $0x10] sm:$0xf]
    %v107 = vld [vmem:[#allocation5 + $0x14] sm:$0xf]
    %v108 = vld [vmem:[#allocation5 + $0x18] sm:$0xf]
    %v109 = vld [vmem:[#allocation5 + $0x1c] sm:$0xf]
    %v110 = vld [vmem:[#allocation5 + $0x20] sm:$0xf]
    %v111 = vld [vmem:[#allocation5 + $0x24] sm:$0xf]
    %v112 = vld [vmem:[#allocation5 + $0x28] sm:$0xf]
    %v113 = vld [vmem:[#allocation5 + $0x2c] sm:$0xf]
    %v114 = vld [vmem:[#allocation5 + $0x30] sm:$0xf]
    %v115 = vld [vmem:[#allocation5 + $0x34] sm:$0xf]
    %v116 = vld [vmem:[#allocation5 + $0x38] sm:$0xf]
    %v117 = vld [vmem:[#allocation5 + $0x3c] sm:$0xf]
    %v118 = vld [vmem:[#allocation5 + $0x40] sm:$0xf]
    %v119 = vld [vmem:[#allocation5 + $0x44] sm:$0xf]
    %v120 = vld [vmem:[#allocation5 + $0x48] sm:$0xf]
    %v121 = vld [vmem:[#allocation5 + $0x4c] sm:$0xf]
    %v122 = vld [vmem:[#allocation5 + $0x50] sm:$0xf]
    %v123 = vld [vmem:[#allocation5 + $0x54] sm:$0xf]
    %v124 = vld [vmem:[#allocation5 + $0x58] sm:$0xf]
    %v125 = vld [vmem:[#allocation5 + $0x5c] sm:$0xf]
    %v126 = vld [vmem:[#allocation5 + $0x60] sm:$0xf]
    %v127 = vld [vmem:[#allocation5 + $0x64] sm:$0xf]
    %v128 = vld [vmem:[#allocation5 + $0x68] sm:$0xf]
    %v129 = vld [vmem:[#allocation5 + $0x6c] sm:$0xf]
    %v130 = vld [vmem:[#allocation5 + $0x70] sm:$0xf]
    %v131 = vld [vmem:[#allocation5 + $0x74] sm:$0xf]
    %v132 = vld [vmem:[#allocation5 + $0x78] sm:$0xf]
    %v133 = vld [vmem:[#allocation5 + $0x7c] sm:$0xf]
    %v134 = vld [vmem:[#allocation5 + $0x80] sm:$0xf]
    %v135 = vld [vmem:[#allocation5 + $0x84] sm:$0xf]
    %v136 = vld [vmem:[#allocation5 + $0x88] sm:$0xf]
    %v137 = vld [vmem:[#allocation5 + $0x8c] sm:$0xf]
    %v138 = vld [vmem:[#allocation5 + $0x90] sm:$0xf]
    %v139 = vld [vmem:[#allocation5 + $0x94] sm:$0xf]
    %v140 = vld [vmem:[#allocation5 + $0x98] sm:$0xf]
    %v141 = vld [vmem:[#allocation5 + $0x9c] sm:$0xf]
    %v142 = vld [vmem:[#allocation5 + $0xa0] sm:$0xf]
    %v143 = vld [vmem:[#allocation5 + $0xa4] sm:$0xf]
    %v144 = vld [vmem:[#allocation5 + $0xa8] sm:$0xf]
    %v145 = vld [vmem:[#allocation5 + $0xac] sm:$0xf]
    %v146 = vld [vmem:[#allocation5 + $0xb0] sm:$0xf]
    %v147 = vld [vmem:[#allocation5 + $0xb4] sm:$0xf]
    %v148 = vld [vmem:[#allocation5 + $0xb8] sm:$0xf]
    %v149 = vld [vmem:[#allocation5 + $0xbc] sm:$0xf]
    %v150 = vld [vmem:[#allocation5 + $0xc0] sm:$0xf]
    %v151 = vld [vmem:[#allocation5 + $0xc4] sm:$0xf]
    %v152 = vld [vmem:[#allocation5 + $0xc8] sm:$0xf]
    %v153 = vld [vmem:[#allocation5 + $0xcc] sm:$0xf]
    %v154 = vld [vmem:[#allocation5 + $0xd0] sm:$0xf]
    %v155 = vld [vmem:[#allocation5 + $0xd4] sm:$0xf]
    %v156 = vld [vmem:[#allocation5 + $0xd8] sm:$0xf]
    %v157 = vld [vmem:[#allocation5 + $0xdc] sm:$0xf]
    %v158 = vld [vmem:[#allocation5 + $0xe0] sm:$0xf]
    %v159 = vld [vmem:[#allocation5 + $0xe4] sm:$0xf]
    %v160 = vld [vmem:[#allocation5 + $0xe8] sm:$0xf]
    %v161 = vld [vmem:[#allocation5 + $0xec] sm:$0xf]
    %v162 = vld [vmem:[#allocation5 + $0xf0] sm:$0xf]
    %v163 = vld [vmem:[#allocation5 + $0xf4] sm:$0xf]
    %v164 = vld [vmem:[#allocation5 + $0xf8] sm:$0xf]
    %v165 = vld [vmem:[#allocation5 + $0xfc] sm:$0xf]
    %v166 = vld [vmem:[#allocation5 + $0x100] sm:$0xf]
    %v167 = vld [vmem:[#allocation5 + $0x104] sm:$0xf]
    %v168 = vld [vmem:[#allocation5 + $0x108] sm:$0xf]
    %v169 = vld [vmem:[#allocation5 + $0x10c] sm:$0xf]
    %v170 = vld [vmem:[#allocation5 + $0x110] sm:$0xf]
    %v171 = vld [vmem:[#allocation5 + $0x114] sm:$0xf]
    %v172 = vld [vmem:[#allocation5 + $0x118] sm:$0xf]
    %v173 = vld [vmem:[#allocation5 + $0x11c] sm:$0xf]
    %v174 = vld [vmem:[#allocation5 + $0x120] sm:$0xf]
    %v175 = vld [vmem:[#allocation5 + $0x124] sm:$0xf]
    %v176 = vld [vmem:[#allocation5 + $0x128] sm:$0xf]
    %v177 = vld [vmem:[#allocation5 + $0x12c] sm:$0xf]
    %v178 = vld [vmem:[#allocation5 + $0x130] sm:$0xf]
    %v179 = vld [vmem:[#allocation5 + $0x134] sm:$0xf]
    %v180 = vld [vmem:[#allocation5 + $0x138] sm:$0xf]
    %v181 = vld [vmem:[#allocation5 + $0x13c] sm:$0xf]
    %v182 = vld [vmem:[#allocation5 + $0x140] sm:$0xf]
    %v183 = vld [vmem:[#allocation5 + $0x144] sm:$0xf]
    %v184 = vld [vmem:[#allocation5 + $0x148] sm:$0xf]
    %v185 = vld [vmem:[#allocation5 + $0x14c] sm:$0xf]
    %v186 = vld [vmem:[#allocation5 + $0x150] sm:$0xf]
    %v187 = vld [vmem:[#allocation5 + $0x154] sm:$0xf]
    %v188 = vld [vmem:[#allocation5 + $0x158] sm:$0xf]
    %v189 = vld [vmem:[#allocation5 + $0x15c] sm:$0xf]
    %v190 = vld [vmem:[#allocation5 + $0x160] sm:$0xf]
    %v191 = vld [vmem:[#allocation5 + $0x164] sm:$0xf]
    %v192 = vld [vmem:[#allocation5 + $0x168] sm:$0xf]
    %v193 = vld [vmem:[#allocation5 + $0x16c] sm:$0xf]
    %v194 = vld [vmem:[#allocation5 + $0x170] sm:$0xf]
    %v195 = vld [vmem:[#allocation5 + $0x174] sm:$0xf]
    %v196 = vld [vmem:[#allocation5 + $0x178] sm:$0xf]
    %v197 = vld [vmem:[#allocation5 + $0x17c] sm:$0xf]
    %v198 = vld [vmem:[#allocation5 + $0x180] sm:$0xf]
    %v199 = vld [vmem:[#allocation5 + $0x184] sm:$0xf]
    %v200 = vld [vmem:[#allocation5 + $0x188] sm:$0xf]
    %v201 = vld [vmem:[#allocation5 + $0x18c] sm:$0xf]
    %v202 = vld [vmem:[#allocation5 + $0x190] sm:$0xf]
    %v203 = vld [vmem:[#allocation5 + $0x194] sm:$0xf]
    %v204 = vld [vmem:[#allocation5 + $0x198] sm:$0xf]
    %v205 = vld [vmem:[#allocation5 + $0x19c] sm:$0xf]
    %v206 = vld [vmem:[#allocation5 + $0x1a0] sm:$0xf]
    %v207 = vld [vmem:[#allocation5 + $0x1a4] sm:$0xf]
    %v208 = vld [vmem:[#allocation5 + $0x1a8] sm:$0xf]
    %v209 = vld [vmem:[#allocation5 + $0x1ac] sm:$0xf]
    %v210 = vld [vmem:[#allocation5 + $0x1b0] sm:$0xf]
    %v211 = vld [vmem:[#allocation5 + $0x1b4] sm:$0xf]
    %v212 = vld [vmem:[#allocation5 + $0x1b8] sm:$0xf]
    %v213 = vld [vmem:[#allocation5 + $0x1bc] sm:$0xf]
    %v214 = vld [vmem:[#allocation5 + $0x1c0] sm:$0xf]
    %v215 = vld [vmem:[#allocation5 + $0x1c4] sm:$0xf]
    %v216 = vld [vmem:[#allocation5 + $0x1c8] sm:$0xf]
    %v217 = vld [vmem:[#allocation5 + $0x1cc] sm:$0xf]
    %v218 = vld [vmem:[#allocation5 + $0x1d0] sm:$0xf]
    %v219 = vld [vmem:[#allocation5 + $0x1d4] sm:$0xf]
    %v220 = vld [vmem:[#allocation5 + $0x1d8] sm:$0xf]
    %v221 = vld [vmem:[#allocation5 + $0x1dc] sm:$0xf]
    %v222 = vld [vmem:[#allocation5 + $0x1e0] sm:$0xf]
    %v223 = vld [vmem:[#allocation5 + $0x1e4] sm:$0xf]
    %v224 = vld [vmem:[#allocation5 + $0x1e8] sm:$0xf]
    %v225 = vld [vmem:[#allocation5 + $0x1ec] sm:$0xf]
    %v226 = vld [vmem:[#allocation5 + $0x1f0] sm:$0xf]
    %v227 = vld [vmem:[#allocation5 + $0x1f4] sm:$0xf]
    %v228 = vld [vmem:[#allocation5 + $0x1f8] sm:$0xf]
    %v229 = vld [vmem:[#allocation5 + $0x1fc] sm:$0xf]
    %v230 = vlaneseq
    %v231 = vshrl.u32 %v230, 7
    %v232 = vsub.s32 0, %v231
    %v233 = vrot.slane %v77, %v232
    %v362 = vunpack.c.l.b16 %v102
    %v363 = vunpack.c.l.b16 %v103
    %v364 = vunpack.c.l.b16 %v104
    %v365 = vunpack.c.l.b16 %v105
    %v366 = vunpack.c.l.b16 %v106
    %v367 = vunpack.c.l.b16 %v107
    %v368 = vunpack.c.l.b16 %v108
    %v369 = vunpack.c.l.b16 %v109
    %v370 = vunpack.c.l.b16 %v110
    %v371 = vunpack.c.l.b16 %v111
    %v372 = vunpack.c.l.b16 %v112
    %v373 = vunpack.c.l.b16 %v113
    %v374 = vunpack.c.l.b16 %v114
    %v375 = vunpack.c.l.b16 %v115
    %v376 = vunpack.c.l.b16 %v116
    %v377 = vunpack.c.l.b16 %v117
    %v378 = vunpack.c.l.b16 %v118
    %v379 = vunpack.c.l.b16 %v119
    %v380 = vunpack.c.l.b16 %v120
    %v381 = vunpack.c.l.b16 %v121
    %v382 = vunpack.c.l.b16 %v122
    %v383 = vunpack.c.l.b16 %v123
    %v384 = vunpack.c.l.b16 %v124
    %v385 = vunpack.c.l.b16 %v125
    %v386 = vunpack.c.l.b16 %v126
    %v387 = vunpack.c.l.b16 %v127
    %v388 = vunpack.c.l.b16 %v128
    %v389 = vunpack.c.l.b16 %v129
    %v390 = vunpack.c.l.b16 %v130
    %v391 = vunpack.c.l.b16 %v131
    %v392 = vunpack.c.l.b16 %v132
    %v393 = vunpack.c.l.b16 %v133
    %v394 = vunpack.c.l.b16 %v134
    %v395 = vunpack.c.l.b16 %v135
    %v396 = vunpack.c.l.b16 %v136
    %v397 = vunpack.c.l.b16 %v137
    %v398 = vunpack.c.l.b16 %v138
    %v399 = vunpack.c.l.b16 %v139
    %v400 = vunpack.c.l.b16 %v140
    %v401 = vunpack.c.l.b16 %v141
    %v402 = vunpack.c.l.b16 %v142
    %v403 = vunpack.c.l.b16 %v143
    %v404 = vunpack.c.l.b16 %v144
    %v405 = vunpack.c.l.b16 %v145
    %v406 = vunpack.c.l.b16 %v146
    %v407 = vunpack.c.l.b16 %v147
    %v408 = vunpack.c.l.b16 %v148
    %v409 = vunpack.c.l.b16 %v149
    %v410 = vunpack.c.l.b16 %v150
    %v411 = vunpack.c.l.b16 %v151
    %v412 = vunpack.c.l.b16 %v152
    %v413 = vunpack.c.l.b16 %v153
    %v414 = vunpack.c.l.b16 %v154
    %v415 = vunpack.c.l.b16 %v155
    %v416 = vunpack.c.l.b16 %v156
    %v417 = vunpack.c.l.b16 %v157
    %v418 = vunpack.c.l.b16 %v158
    %v419 = vunpack.c.l.b16 %v159
    %v420 = vunpack.c.l.b16 %v160
    %v421 = vunpack.c.l.b16 %v161
    %v422 = vunpack.c.l.b16 %v162
    %v423 = vunpack.c.l.b16 %v163
    %v424 = vunpack.c.l.b16 %v164
    %v425 = vunpack.c.l.b16 %v165
    %v426 = vunpack.c.l.b16 %v166
    %v427 = vunpack.c.l.b16 %v167
    %v428 = vunpack.c.l.b16 %v168
    %v429 = vunpack.c.l.b16 %v169
    %v430 = vunpack.c.l.b16 %v170
    %v431 = vunpack.c.l.b16 %v171
    %v432 = vunpack.c.l.b16 %v172
    %v433 = vunpack.c.l.b16 %v173
    %v434 = vunpack.c.l.b16 %v174
    %v435 = vunpack.c.l.b16 %v175
    %v436 = vunpack.c.l.b16 %v176
    %v437 = vunpack.c.l.b16 %v177
    %v438 = vunpack.c.l.b16 %v178
    %v439 = vunpack.c.l.b16 %v179
    %v440 = vunpack.c.l.b16 %v180
    %v441 = vunpack.c.l.b16 %v181
    %v442 = vunpack.c.l.b16 %v182
    %v443 = vunpack.c.l.b16 %v183
    %v444 = vunpack.c.l.b16 %v184
    %v445 = vunpack.c.l.b16 %v185
    %v446 = vunpack.c.l.b16 %v186
    %v447 = vunpack.c.l.b16 %v187
    %v448 = vunpack.c.l.b16 %v188
    %v449 = vunpack.c.l.b16 %v189
    %v450 = vunpack.c.l.b16 %v190
    %v451 = vunpack.c.l.b16 %v191
    %v452 = vunpack.c.l.b16 %v192
    %v453 = vunpack.c.l.b16 %v193
    %v454 = vunpack.c.l.b16 %v194
    %v455 = vunpack.c.l.b16 %v195
    %v456 = vunpack.c.l.b16 %v196
    %v457 = vunpack.c.l.b16 %v197
    %v458 = vunpack.c.l.b16 %v198
    %v459 = vunpack.c.l.b16 %v199
    %v460 = vunpack.c.l.b16 %v200
    %v461 = vunpack.c.l.b16 %v201
    %v462 = vunpack.c.l.b16 %v202
    %v463 = vunpack.c.l.b16 %v203
    %v464 = vunpack.c.l.b16 %v204
    %v465 = vunpack.c.l.b16 %v205
    %v466 = vunpack.c.l.b16 %v206
    %v467 = vunpack.c.l.b16 %v207
    %v468 = vunpack.c.l.b16 %v208
    %v469 = vunpack.c.l.b16 %v209
    %v470 = vunpack.c.l.b16 %v210
    %v471 = vunpack.c.l.b16 %v211
    %v472 = vunpack.c.l.b16 %v212
    %v473 = vunpack.c.l.b16 %v213
    %v474 = vunpack.c.l.b16 %v214
    %v475 = vunpack.c.l.b16 %v215
    %v476 = vunpack.c.l.b16 %v216
    %v477 = vunpack.c.l.b16 %v217
    %v478 = vunpack.c.l.b16 %v218
    %v479 = vunpack.c.l.b16 %v219
    %v480 = vunpack.c.l.b16 %v220
    %v481 = vunpack.c.l.b16 %v221
    %v482 = vunpack.c.l.b16 %v222
    %v483 = vunpack.c.l.b16 %v223
    %v484 = vunpack.c.l.b16 %v224
    %v485 = vunpack.c.l.b16 %v225
    %v486 = vunpack.c.l.b16 %v226
    %v487 = vunpack.c.l.b16 %v227
    %v488 = vunpack.c.l.b16 %v228
    %v489 = vunpack.c.l.b16 %v229
    %v490 = vpack.c.b16 %v363, %v362
    %v491 = vpack.c.b16 %v365, %v364
    %v492 = vpack.c.b16 %v367, %v366
    %v493 = vpack.c.b16 %v369, %v368
    %v494 = vpack.c.b16 %v371, %v370
    %v495 = vpack.c.b16 %v373, %v372
    %v496 = vpack.c.b16 %v375, %v374
    %v497 = vpack.c.b16 %v377, %v376
    %v498 = vpack.c.b16 %v379, %v378
    %v499 = vpack.c.b16 %v381, %v380
    %v500 = vpack.c.b16 %v383, %v382
    %v501 = vpack.c.b16 %v385, %v384
    %v502 = vpack.c.b16 %v387, %v386
    %v503 = vpack.c.b16 %v389, %v388
    %v504 = vpack.c.b16 %v391, %v390
    %v505 = vpack.c.b16 %v393, %v392
    %v506 = vpack.c.b16 %v395, %v394
    %v507 = vpack.c.b16 %v397, %v396
    %v508 = vpack.c.b16 %v399, %v398
    %v509 = vpack.c.b16 %v401, %v400
    %v510 = vpack.c.b16 %v403, %v402
    %v511 = vpack.c.b16 %v405, %v404
    %v512 = vpack.c.b16 %v407, %v406
    %v513 = vpack.c.b16 %v409, %v408
    %v514 = vpack.c.b16 %v411, %v410
    %v515 = vpack.c.b16 %v413, %v412
    %v516 = vpack.c.b16 %v415, %v414
    %v517 = vpack.c.b16 %v417, %v416
    %v518 = vpack.c.b16 %v419, %v418
    %v519 = vpack.c.b16 %v421, %v420
    %v520 = vpack.c.b16 %v423, %v422
    %v521 = vpack.c.b16 %v425, %v424
    %v522 = vpack.c.b16 %v427, %v426
    %v523 = vpack.c.b16 %v429, %v428
    %v524 = vpack.c.b16 %v431, %v430
    %v525 = vpack.c.b16 %v433, %v432
    %v526 = vpack.c.b16 %v435, %v434
    %v527 = vpack.c.b16 %v437, %v436
    %v528 = vpack.c.b16 %v439, %v438
    %v529 = vpack.c.b16 %v441, %v440
    %v530 = vpack.c.b16 %v443, %v442
    %v531 = vpack.c.b16 %v445, %v444
    %v532 = vpack.c.b16 %v447, %v446
    %v533 = vpack.c.b16 %v449, %v448
    %v534 = vpack.c.b16 %v451, %v450
    %v535 = vpack.c.b16 %v453, %v452
    %v536 = vpack.c.b16 %v455, %v454
    %v537 = vpack.c.b16 %v457, %v456
    %v538 = vpack.c.b16 %v459, %v458
    %v539 = vpack.c.b16 %v461, %v460
    %v540 = vpack.c.b16 %v463, %v462
    %v541 = vpack.c.b16 %v465, %v464
    %v542 = vpack.c.b16 %v467, %v466
    %v543 = vpack.c.b16 %v469, %v468
    %v544 = vpack.c.b16 %v471, %v470
    %v545 = vpack.c.b16 %v473, %v472
    %v546 = vpack.c.b16 %v475, %v474
    %v547 = vpack.c.b16 %v477, %v476
    %v548 = vpack.c.b16 %v479, %v478
    %v549 = vpack.c.b16 %v481, %v480
    %v550 = vpack.c.b16 %v483, %v482
    %v551 = vpack.c.b16 %v485, %v484
    %v552 = vpack.c.b16 %v487, %v486
    %v553 = vpack.c.b16 %v489, %v488
    %618 = vmatprep.subr.bf16.mxu0 0
    %619 = vmatpush1.bf16.msra.mxu0 %v490
    %620 = vmatprep.subr.bf16.mxu0 0
    %621 = vmatpush1.bf16.msra.mxu0 %v491
    %622 = vmatprep.subr.bf16.mxu0 0
    %623 = vmatpush1.bf16.msra.mxu0 %v492
    %624 = vmatprep.subr.bf16.mxu0 0
    %625 = vmatpush1.bf16.msra.mxu0 %v493
    %626 = vmatprep.subr.bf16.mxu0 0
    %627 = vmatpush1.bf16.msra.mxu0 %v494
    %628 = vmatprep.subr.bf16.mxu0 0
    %629 = vmatpush1.bf16.msra.mxu0 %v495
    %630 = vmatprep.subr.bf16.mxu0 0
    %631 = vmatpush1.bf16.msra.mxu0 %v496
    %632 = vmatprep.subr.bf16.mxu0 0
    %633 = vmatpush1.bf16.msra.mxu0 %v497
    %634 = vmatprep.subr.bf16.mxu0 0
    %635 = vmatpush1.bf16.msra.mxu0 %v498
    %636 = vmatprep.subr.bf16.mxu0 0
    %637 = vmatpush1.bf16.msra.mxu0 %v499
    %638 = vmatprep.subr.bf16.mxu0 0
    %639 = vmatpush1.bf16.msra.mxu0 %v500
    %640 = vmatprep.subr.bf16.mxu0 0
    %641 = vmatpush1.bf16.msra.mxu0 %v501
    %642 = vmatprep.subr.bf16.mxu0 0
    %643 = vmatpush1.bf16.msra.mxu0 %v502
    %644 = vmatprep.subr.bf16.mxu0 0
    %645 = vmatpush1.bf16.msra.mxu0 %v503
    %646 = vmatprep.subr.bf16.mxu0 0
    %647 = vmatpush1.bf16.msra.mxu0 %v504
    %648 = vmatprep.subr.bf16.mxu0 0
    %649 = vmatpush1.bf16.msra.mxu0 %v505
    %650 = vmatprep.mubr.bf16.mxu0 %v95
    %651 = vmatmul.mubr.bf16.gmra.mrb[0].mxu0 %v94
    %v652 = vpop.f32.mrb[0].mxu0
    %v653 = vadd.f32 %v233, %v652
    %v654 = vpop.f32.mrb[0].mxu0
    %v655 = vpop.f32.mrb[0].mxu0
    %v656 = vadd.f32 %v233, %v655
    %v657 = vpop.f32.mrb[0].mxu0
    %658 = vdwg.mxu0
    %659 = vmatprep.subr.bf16.mxu0 0
    %660 = vmatpush1.bf16.msra.mxu0 %v506
    %661 = vmatprep.subr.bf16.mxu0 0
    %662 = vmatpush1.bf16.msra.mxu0 %v507
    %663 = vmatprep.subr.bf16.mxu0 0
    %664 = vmatpush1.bf16.msra.mxu0 %v508
    %665 = vmatprep.subr.bf16.mxu0 0
    %666 = vmatpush1.bf16.msra.mxu0 %v509
    %667 = vmatprep.subr.bf16.mxu0 0
    %668 = vmatpush1.bf16.msra.mxu0 %v510
    %669 = vmatprep.subr.bf16.mxu0 0
    %670 = vmatpush1.bf16.msra.mxu0 %v511
    %671 = vmatprep.subr.bf16.mxu0 0
    %672 = vmatpush1.bf16.msra.mxu0 %v512
    %673 = vmatprep.subr.bf16.mxu0 0
    %674 = vmatpush1.bf16.msra.mxu0 %v513
    %675 = vmatprep.subr.bf16.mxu0 0
    %676 = vmatpush1.bf16.msra.mxu0 %v514
    %677 = vmatprep.subr.bf16.mxu0 0
    %678 = vmatpush1.bf16.msra.mxu0 %v515
    %679 = vmatprep.subr.bf16.mxu0 0
    %680 = vmatpush1.bf16.msra.mxu0 %v516
    %681 = vmatprep.subr.bf16.mxu0 0
    %682 = vmatpush1.bf16.msra.mxu0 %v517
    %683 = vmatprep.subr.bf16.mxu0 0
    %684 = vmatpush1.bf16.msra.mxu0 %v518
    %685 = vmatprep.subr.bf16.mxu0 0
    %686 = vmatpush1.bf16.msra.mxu0 %v519
    %687 = vmatprep.subr.bf16.mxu0 0
    %688 = vmatpush1.bf16.msra.mxu0 %v520
    %689 = vmatprep.subr.bf16.mxu0 0
    %690 = vmatpush1.bf16.msra.mxu0 %v521
    %691 = vmatprep.mubr.bf16.mxu0 %v97
    %692 = vmatmul.mubr.bf16.gmra.mrb[0].mxu0 %v96
    %v693 = vpop.f32.mrb[0].mxu0
    %v694 = vadd.f32 %v653, %v693
    %v695 = vpop.f32.mrb[0].mxu0
    %v696 = vpop.f32.mrb[0].mxu0
    %v697 = vadd.f32 %v656, %v696
    %v698 = vpop.f32.mrb[0].mxu0
    %699 = vdwg.mxu0
    %700 = vmatprep.subr.bf16.mxu0 0
    %701 = vmatpush1.bf16.msra.mxu0 %v522
    %702 = vmatprep.subr.bf16.mxu0 0
    %703 = vmatpush1.bf16.msra.mxu0 %v523
    %704 = vmatprep.subr.bf16.mxu0 0
    %705 = vmatpush1.bf16.msra.mxu0 %v524
    %706 = vmatprep.subr.bf16.mxu0 0
    %707 = vmatpush1.bf16.msra.mxu0 %v525
    %708 = vmatprep.subr.bf16.mxu0 0
    %709 = vmatpush1.bf16.msra.mxu0 %v526
    %710 = vmatprep.subr.bf16.mxu0 0
    %711 = vmatpush1.bf16.msra.mxu0 %v527
    %712 = vmatprep.subr.bf16.mxu0 0
    %713 = vmatpush1.bf16.msra.mxu0 %v528
    %714 = vmatprep.subr.bf16.mxu0 0
    %715 = vmatpush1.bf16.msra.mxu0 %v529
    %716 = vmatprep.subr.bf16.mxu0 0
    %717 = vmatpush1.bf16.msra.mxu0 %v530
    %718 = vmatprep.subr.bf16.mxu0 0
    %719 = vmatpush1.bf16.msra.mxu0 %v531
    %720 = vmatprep.subr.bf16.mxu0 0
    %721 = vmatpush1.bf16.msra.mxu0 %v532
    %722 = vmatprep.subr.bf16.mxu0 0
    %723 = vmatpush1.bf16.msra.mxu0 %v533
    %724 = vmatprep.subr.bf16.mxu0 0
    %725 = vmatpush1.bf16.msra.mxu0 %v534
    %726 = vmatprep.subr.bf16.mxu0 0
    %727 = vmatpush1.bf16.msra.mxu0 %v535
    %728 = vmatprep.subr.bf16.mxu0 0
    %729 = vmatpush1.bf16.msra.mxu0 %v536
    %730 = vmatprep.subr.bf16.mxu0 0
    %731 = vmatpush1.bf16.msra.mxu0 %v537
    %732 = vmatprep.mubr.bf16.mxu0 %v99
    %733 = vmatmul.mubr.bf16.gmra.mrb[0].mxu0 %v98
    %v734 = vpop.f32.mrb[0].mxu0
    %v735 = vadd.f32 %v694, %v734
    %v736 = vpop.f32.mrb[0].mxu0
    %v737 = vpop.f32.mrb[0].mxu0
    %v738 = vadd.f32 %v697, %v737
    %v739 = vpop.f32.mrb[0].mxu0
    %740 = vdwg.mxu0
    %741 = vmatprep.subr.bf16.mxu0 0
    %742 = vmatpush1.bf16.msra.mxu0 %v538
    %743 = vmatprep.subr.bf16.mxu0 0
    %744 = vmatpush1.bf16.msra.mxu0 %v539
    %745 = vmatprep.subr.bf16.mxu0 0
    %746 = vmatpush1.bf16.msra.mxu0 %v540
    %747 = vmatprep.subr.bf16.mxu0 0
    %748 = vmatpush1.bf16.msra.mxu0 %v541
    %749 = vmatprep.subr.bf16.mxu0 0
    %750 = vmatpush1.bf16.msra.mxu0 %v542
    %751 = vmatprep.subr.bf16.mxu0 0
    %752 = vmatpush1.bf16.msra.mxu0 %v543
    %753 = vmatprep.subr.bf16.mxu0 0
    %754 = vmatpush1.bf16.msra.mxu0 %v544
    %755 = vmatprep.subr.bf16.mxu0 0
    %756 = vmatpush1.bf16.msra.mxu0 %v545
    %757 = vmatprep.subr.bf16.mxu0 0
    %758 = vmatpush1.bf16.msra.mxu0 %v546
    %759 = vmatprep.subr.bf16.mxu0 0
    %760 = vmatpush1.bf16.msra.mxu0 %v547
    %761 = vmatprep.subr.bf16.mxu0 0
    %762 = vmatpush1.bf16.msra.mxu0 %v548
    %763 = vmatprep.subr.bf16.mxu0 0
    %764 = vmatpush1.bf16.msra.mxu0 %v549
    %765 = vmatprep.subr.bf16.mxu0 0
    %766 = vmatpush1.bf16.msra.mxu0 %v550
    %767 = vmatprep.subr.bf16.mxu0 0
    %768 = vmatpush1.bf16.msra.mxu0 %v551
    %769 = vmatprep.subr.bf16.mxu0 0
    %770 = vmatpush1.bf16.msra.mxu0 %v552
    %771 = vmatprep.subr.bf16.mxu0 0
    %772 = vmatpush1.bf16.msra.mxu0 %v553
    %773 = vmatprep.mubr.bf16.mxu0 %v101
    %774 = vmatmul.mubr.bf16.gmra.mrb[0].mxu0 %v100
    %v775 = vpop.f32.mrb[0].mxu0
    %v776 = vadd.f32 %v735, %v775
    %v777 = vpop.f32.mrb[0].mxu0
    %v778 = vpop.f32.mrb[0].mxu0
    %v779 = vadd.f32 %v738, %v778
    %v780 = vpop.f32.mrb[0].mxu0
    %781 = vdwg.mxu0
    %v782 = vmax.f32 %v776, 0.0
    %v783 = vmax.f32 %v779, 0.0
    %v784 = vpack.c.bf16 %v783, %v782
    %v785 = vld [vmem:[#allocation7] sm:$0xf]
    %v786 = vld [vmem:[#allocation7 + $0x4] sm:$0xf]
    %v787 = vld [vmem:[#allocation7 + $0x8] sm:$0xf]
    %v788 = vld [vmem:[#allocation7 + $0xc] sm:$0xf]
    %v789 = vld [vmem:[#allocation7 + $0x10] sm:$0xf]
    %v790 = vld [vmem:[#allocation7 + $0x14] sm:$0xf]
    %v791 = vld [vmem:[#allocation7 + $0x18] sm:$0xf]
    %v792 = vld [vmem:[#allocation7 + $0x1c] sm:$0xf]
    %v793 = vld [vmem:[#allocation7 + $0x20] sm:$0xf]
    %v794 = vld [vmem:[#allocation7 + $0x24] sm:$0xf]
    %v795 = vld [vmem:[#allocation7 + $0x28] sm:$0xf]
    %v796 = vld [vmem:[#allocation7 + $0x2c] sm:$0xf]
    %v797 = vld [vmem:[#allocation7 + $0x30] sm:$0xf]
    %v798 = vld [vmem:[#allocation7 + $0x34] sm:$0xf]
    %v799 = vld [vmem:[#allocation7 + $0x38] sm:$0xf]
    %v800 = vld [vmem:[#allocation7 + $0x3c] sm:$0xf]
    %v801 = vlaneseq
    %v802 = vshrl.u32 %v801, 7
    %v803 = vsub.s32 1, %v802
    %v804 = vrot.slane %v77, %v803
    %v821 = vunpack.c.l.b16 %v785
    %v822 = vunpack.c.l.b16 %v786
    %v823 = vunpack.c.l.b16 %v787
    %v824 = vunpack.c.l.b16 %v788
    %v825 = vunpack.c.l.b16 %v789
    %v826 = vunpack.c.l.b16 %v790
    %v827 = vunpack.c.l.b16 %v791
    %v828 = vunpack.c.l.b16 %v792
    %v829 = vunpack.c.l.b16 %v793
    %v830 = vunpack.c.l.b16 %v794
    %v831 = vunpack.c.l.b16 %v795
    %v832 = vunpack.c.l.b16 %v796
    %v833 = vunpack.c.l.b16 %v797
    %v834 = vunpack.c.l.b16 %v798
    %v835 = vunpack.c.l.b16 %v799
    %v836 = vunpack.c.l.b16 %v800
    %v837 = vpack.c.b16 %v822, %v821
    %v838 = vpack.c.b16 %v824, %v823
    %v839 = vpack.c.b16 %v826, %v825
    %v840 = vpack.c.b16 %v828, %v827
    %v841 = vpack.c.b16 %v830, %v829
    %v842 = vpack.c.b16 %v832, %v831
    %v843 = vpack.c.b16 %v834, %v833
    %v844 = vpack.c.b16 %v836, %v835
    %853 = vmatprep.subr.bf16.mxu0 0
    %854 = vmatpush1.bf16.msra.mxu0 %v837
    %855 = vmatprep.subr.bf16.mxu0 0
    %856 = vmatpush1.bf16.msra.mxu0 %v838
    %857 = vmatprep.subr.bf16.mxu0 0
    %858 = vmatpush1.bf16.msra.mxu0 %v839
    %859 = vmatprep.subr.bf16.mxu0 0
    %860 = vmatpush1.bf16.msra.mxu0 %v840
    %861 = vmatprep.subr.bf16.mxu0 0
    %862 = vmatpush1.bf16.msra.mxu0 %v841
    %863 = vmatprep.subr.bf16.mxu0 0
    %864 = vmatpush1.bf16.msra.mxu0 %v842
    %865 = vmatprep.subr.bf16.mxu0 0
    %866 = vmatpush1.bf16.msra.mxu0 %v843
    %867 = vmatprep.subr.bf16.mxu0 0
    %868 = vmatpush1.bf16.msra.mxu0 %v844
    %869 = vmatprep.subr.bf16.mxu0 0
    %870 = vmatpush1.bf16.msra.mxu0 0
    %871 = vmatprep.subr.bf16.mxu0 0
    %872 = vmatpush1.bf16.msra.mxu0 0
    %873 = vmatprep.subr.bf16.mxu0 0
    %874 = vmatpush1.bf16.msra.mxu0 0
    %875 = vmatprep.subr.bf16.mxu0 0
    %876 = vmatpush1.bf16.msra.mxu0 0
    %877 = vmatprep.subr.bf16.mxu0 0
    %878 = vmatpush1.bf16.msra.mxu0 0
    %879 = vmatprep.subr.bf16.mxu0 0
    %880 = vmatpush1.bf16.msra.mxu0 0
    %881 = vmatprep.subr.bf16.mxu0 0
    %882 = vmatpush1.bf16.msra.mxu0 0
    %883 = vmatprep.subr.bf16.mxu0 0
    %884 = vmatpush1.bf16.msra.mxu0 0
    %885 = vmatprep.mubr.bf16.mxu0 0
    %886 = vmatmul.mubr.bf16.gmra.mrb[0].mxu0 %v784
    %v887 = vpop.f32.mrb[0].mxu0
    %v888 = vadd.f32 %v804, %v887
    %v889 = vpop.f32.mrb[0].mxu0
    %v890 = vpop.f32.mrb[0].mxu0
    %v891 = vadd.f32 %v804, %v890
    %v892 = vpop.f32.mrb[0].mxu0
    %893 = vdwg.mxu0
    %v894 = vmax.f32 %v888, 0.0
    %v895 = vmax.f32 %v891, 0.0
    %v896 = vpack.c.bf16 %v895, %v894
    %v897 = vld [vmem:[#allocation8] sm:$0xf]
    %v898 = vld [vmem:[#allocation8 + $0x4] sm:$0xf]
    %v899 = vld [vmem:[#allocation8 + $0x8] sm:$0xf]
    %v900 = vld [vmem:[#allocation8 + $0xc] sm:$0xf]
    %v901 = vld [vmem:[#allocation8 + $0x10] sm:$0xf]
    %v902 = vld [vmem:[#allocation8 + $0x14] sm:$0xf]
    %v903 = vld [vmem:[#allocation8 + $0x18] sm:$0xf]
    %v904 = vld [vmem:[#allocation8 + $0x1c] sm:$0xf]
    %v905 = vld [vmem:[#allocation8 + $0x20] sm:$0xf]
    %v906 = vld [vmem:[#allocation8 + $0x24] sm:$0xf]
    %v907 = vld [vmem:[#allocation8 + $0x28] sm:$0xf]
    %v908 = vld [vmem:[#allocation8 + $0x2c] sm:$0xf]
    %v909 = vld [vmem:[#allocation8 + $0x30] sm:$0xf]
    %v910 = vld [vmem:[#allocation8 + $0x34] sm:$0xf]
    %v911 = vld [vmem:[#allocation8 + $0x38] sm:$0xf]
    %v912 = vld [vmem:[#allocation8 + $0x3c] sm:$0xf]
    %v913 = vlaneseq
    %v914 = vshrl.u32 %v913, 7
    %v915 = vsub.s32 2, %v914
    %v916 = vrot.slane %v77, %v915
    %v933 = vunpack.c.l.b16 %v897
    %v934 = vunpack.c.l.b16 %v898
    %v935 = vunpack.c.l.b16 %v899
    %v936 = vunpack.c.l.b16 %v900
    %v937 = vunpack.c.l.b16 %v901
    %v938 = vunpack.c.l.b16 %v902
    %v939 = vunpack.c.l.b16 %v903
    %v940 = vunpack.c.l.b16 %v904
    %v941 = vunpack.c.l.b16 %v905
    %v942 = vunpack.c.l.b16 %v906
    %v943 = vunpack.c.l.b16 %v907
    %v944 = vunpack.c.l.b16 %v908
    %v945 = vunpack.c.l.b16 %v909
    %v946 = vunpack.c.l.b16 %v910
    %v947 = vunpack.c.l.b16 %v911
    %v948 = vunpack.c.l.b16 %v912
    %v949 = vpack.c.b16 %v934, %v933
    %v950 = vpack.c.b16 %v936, %v935
    %v951 = vpack.c.b16 %v938, %v937
    %v952 = vpack.c.b16 %v940, %v939
    %v953 = vpack.c.b16 %v942, %v941
    %v954 = vpack.c.b16 %v944, %v943
    %v955 = vpack.c.b16 %v946, %v945
    %v956 = vpack.c.b16 %v948, %v947
    %965 = vmatprep.subr.bf16.mxu0 0
    %966 = vmatpush1.bf16.msra.mxu0 %v949
    %967 = vmatprep.subr.bf16.mxu0 0
    %968 = vmatpush1.bf16.msra.mxu0 %v950
    %969 = vmatprep.subr.bf16.mxu0 0
    %970 = vmatpush1.bf16.msra.mxu0 %v951
    %971 = vmatprep.subr.bf16.mxu0 0
    %972 = vmatpush1.bf16.msra.mxu0 %v952
    %973 = vmatprep.subr.bf16.mxu0 0
    %974 = vmatpush1.bf16.msra.mxu0 %v953
    %975 = vmatprep.subr.bf16.mxu0 0
    %976 = vmatpush1.bf16.msra.mxu0 %v954
    %977 = vmatprep.subr.bf16.mxu0 0
    %978 = vmatpush1.bf16.msra.mxu0 %v955
    %979 = vmatprep.subr.bf16.mxu0 0
    %980 = vmatpush1.bf16.msra.mxu0 %v956
    %981 = vmatprep.subr.bf16.mxu0 0
    %982 = vmatpush1.bf16.msra.mxu0 0
    %983 = vmatprep.subr.bf16.mxu0 0
    %984 = vmatpush1.bf16.msra.mxu0 0
    %985 = vmatprep.subr.bf16.mxu0 0
    %986 = vmatpush1.bf16.msra.mxu0 0
    %987 = vmatprep.subr.bf16.mxu0 0
    %988 = vmatpush1.bf16.msra.mxu0 0
    %989 = vmatprep.subr.bf16.mxu0 0
    %990 = vmatpush1.bf16.msra.mxu0 0
    %991 = vmatprep.subr.bf16.mxu0 0
    %992 = vmatpush1.bf16.msra.mxu0 0
    %993 = vmatprep.subr.bf16.mxu0 0
    %994 = vmatpush1.bf16.msra.mxu0 0
    %995 = vmatprep.subr.bf16.mxu0 0
    %996 = vmatpush1.bf16.msra.mxu0 0
    %997 = vmatprep.mubr.bf16.mxu0 0
    %998 = vmatmul.mubr.bf16.gmra.mrb[0].mxu0 %v896
    %v999 = vpop.f32.mrb[0].mxu0
    %v1000 = vadd.f32 %v916, %v999
    %v1001 = vpop.f32.mrb[0].mxu0
    %v1002 = vpop.f32.mrb[0].mxu0
    %v1003 = vadd.f32 %v916, %v1002
    %v1004 = vpop.f32.mrb[0].mxu0
    %1005 = vdwg.mxu0
    %v1006 = vxor.u32 %v1000, 2147483648
    %v1007 = vxor.u32 %v1003, 2147483648
    %v1008 = vmul.f32 %v1006, 1.442695
    %v1009 = vpow.pop %v1008
    %v1010 = vmul.f32 %v1007, 1.442695
    %v1011 = vpow.pop %v1010
    %v1012 = vadd.f32 %v1009, 1.0
    %v1013 = vadd.f32 %v1011, 1.0
    %v1014 = vrcp.pop %v1012
    %v1015 = vmul.f32 1.0, %v1014
    %v1016 = vrcp.pop %v1013
    %v1017 = vmul.f32 1.0, %v1016
    %v1018 = vpack.c.bf16 %v1017, %v1015
    %v1020 = vunpack.c.l.b16 %v1018
    %v1021 = vunpack.c.h.b16 %v1018
    %v1022 = vpack.c.b16 %v1020, %v1020
    %v1023 = vpack.c.b16 %v1021, %v1021
    %1026 = vst [vmem:[#allocation10] sm:$0xf] %v1022
    %1027 = vst [vmem:[#allocation10 + $0x4] sm:$0xf] %v1023
    // Predicated region
    $region38: #{tpu_custom_call.1} parent=1 // pred_check
      _
    $region39: #{tpu_custom_call.1} parent=1 // pred_check_branch
      %1029 = sbr.rel (0) target = $region41
    $region40: #{tpu_custom_call.1} parent=1 // pred_region
      %s1031 = ssub.s32 128, 128
      %1032 = vsyncadd [#allocation4], %s1031
      %s1033 = sshll.u32 [#allocation10], 4
      %s1034 = int_to_ptr.vmem [resolvable:$true] %s1033
      %1039 = dma.vmem_to_hbm [thread:$0]  %s1034, 128, %s5, [#allocation4], 64, 64, 4
    $region41: #{tpu_custom_call.1} parent=1 // pred_fallthru
      _
    // Predicated region
    $region42: #{tpu_custom_call.1} parent=1 // pred_check
      _
    $region43: #{tpu_custom_call.1} parent=1 // pred_check_branch
      %1041 = sbr.rel (0) target = $region45
    $region44: #{tpu_custom_call.1} parent=1 // pred_region
      %1042 = dma.done [#allocation4], 128
    $region45: #{tpu_custom_call.1} parent=1 // pred_fallthru
      _
    %1043 = vsyncpa [#allocation3], 1
    %1044 = vsyncpa [#allocation6], 1
    %1045 = vsyncpa [#allocation9], 1
    %1046 = vsyncpa [#allocation4], 1

</llo_original>
